<compile_context>
chip_gen: v5e
topology: v5e:2x2
jax: 0.10.0
libtpu: 0.0.40
codegen_flags: <defaults>
</compile_context>

<pallas_src>
import jax
import jax.numpy as jnp
from jax.experimental import pallas as pl
from jax.experimental.pallas import tpu as pltpu

LATENT_DIM = 64
IN_DIM = 784


def _round_up(n, m):
    return ((n + m - 1) // m) * m


def ae_kernel(x_ref,
              w1_ref, b1_ref, w2_ref, b2_ref, w3_ref, b3_ref,
              w4_ref, b4_ref, w5_ref, b5_ref, w6_ref, b6_ref,
              xhat_ref, z_ref):
    x = x_ref[...]

    def linear(h, w_ref, b_ref):
        return jnp.dot(h, w_ref[...],
                       preferred_element_type=jnp.float32) + b_ref[...]

    # ---- encode ----
    h = jnp.maximum(linear(x, w1_ref, b1_ref), 0.0)   # relu(fc_enc1)
    h = jnp.maximum(linear(h, w2_ref, b2_ref), 0.0)   # relu(fc_enc2)
    z = jnp.maximum(linear(h, w3_ref, b3_ref), 0.0)   # relu(fc_enc3); padded lanes stay 0

    # ---- decode ----
    d = jnp.maximum(linear(z, w4_ref, b4_ref), 0.0)   # relu(fc_dec1)
    d = jnp.maximum(linear(d, w5_ref, b5_ref), 0.0)   # relu(fc_dec2)
    xhat = jax.nn.sigmoid(linear(d, w6_ref, b6_ref))  # sigmoid(fc_dec3)

    xhat_ref[...] = xhat.astype(xhat_ref.dtype)
    z_ref[...] = z.astype(z_ref.dtype)


def ae_forward(x, params, *, batch_tile=512):
    """x: (B, 784) f32 -> (xHat (B, 784), z (B, latent_dim))."""
    B, D = x.shape
    assert D == IN_DIM
    (w1, b1), (w2, b2), (w3, b3), (w4, b4), (w5, b5), (w6, b6) = params
    latent = w3.shape[1]

    # ---- effective batch tile: multiple of 8, no larger than needed ----
    bt = max(8, min(_round_up(batch_tile, 8), _round_up(B, 8)))
    Bp = _round_up(B, bt)

    # ---- lane-dense padded feature dims ----
    Dp = _round_up(D, 128)        # 784 -> 896
    Zp = _round_up(latent, 128)   # 64  -> 128

    # ---- pad activations / weights (zeros keep the math identical) ----
    x_p = jnp.pad(x, ((0, Bp - B), (0, Dp - D)))
    w1_p = jnp.pad(w1, ((0, Dp - D), (0, 0)))            # (Dp, 32)
    w3_p = jnp.pad(w3, ((0, 0), (0, Zp - latent)))       # (16, Zp)
    b3_p = jnp.pad(b3, ((0, 0), (0, Zp - latent)))       # (1, Zp)
    w4_p = jnp.pad(w4, ((0, Zp - latent), (0, 0)))       # (Zp, 16)
    w6_p = jnp.pad(w6, ((0, 0), (0, Dp - D)))            # (32, Dp)
    b6_p = jnp.pad(b6, ((0, 0), (0, Dp - D)))            # (1, Dp)

    param_list = [w1_p, b1, w2, b2, w3_p, b3_p,
                  w4_p, b4, w5, b5, w6_p, b6_p]

    grid = (Bp // bt,)

    x_spec = pl.BlockSpec((bt, Dp), lambda i: (i, 0))

    def param_spec(arr):
        shp = arr.shape
        return pl.BlockSpec(shp, lambda i: tuple(0 for _ in shp))

    in_specs = [x_spec] + [param_spec(p) for p in param_list]

    out_specs = [
        pl.BlockSpec((bt, Dp), lambda i: (i, 0)),
        pl.BlockSpec((bt, Zp), lambda i: (i, 0)),
    ]
    out_shape = [
        jax.ShapeDtypeStruct((Bp, Dp), jnp.float32),
        jax.ShapeDtypeStruct((Bp, Zp), jnp.float32),
    ]

    # ---- VMEM budget: double-buffered x/xhat/z tiles + replicated params ----
    param_bytes = sum(int(p.size) * 4 for p in param_list)
    act_bytes = bt * (Dp + Dp + Zp) * 4
    est = 2 * (act_bytes + param_bytes)
    vmem_limit = int(min(max(2 * est, 32 * 1024 * 1024), 48 * 1024 * 1024))

    xhat_p, z_p = pl.pallas_call(
        ae_kernel,
        grid=grid,
        in_specs=in_specs,
        out_specs=out_specs,
        out_shape=out_shape,
        compiler_params=pltpu.CompilerParams(
            dimension_semantics=("parallel",),
            vmem_limit_bytes=vmem_limit),
    )(x_p, *param_list)

    return xhat_p[:B, :D], z_p[:B, :latent]


# Jitted entry point (static tile so the pallas_call shape is fixed per config).
ae_forward_jit = jax.jit(ae_forward, static_argnames=("batch_tile",))


def init_params(key, latent_dim=LATENT_DIM):
    """Deterministic param init, shapes matching the PyTorch module.

    Weights stored as (in, out); biases as (1, out) for clean broadcasting.
    """
    dims = [(IN_DIM, 32), (32, 16), (16, latent_dim),
            (latent_dim, 16), (16, 32), (32, IN_DIM)]
    params = []
    for (fan_in, fan_out) in dims:
        key, kw, kb = jax.random.split(key, 3)
        bound = 1.0 / jnp.sqrt(fan_in)  # same scheme as nn.Linear default
        w = jax.random.uniform(kw, (fan_in, fan_out), jnp.float32,
                               -bound, bound)
        b = jax.random.uniform(kb, (1, fan_out), jnp.float32, -bound, bound)
        params.append((w, b))
    return params


def ae_forward_ref(x, params):
    """Pure-JAX reference for correctness checking."""
    (w1, b1), (w2, b2), (w3, b3), (w4, b4), (w5, b5), (w6, b6) = params
    h = jax.nn.relu(x @ w1 + b1)
    h = jax.nn.relu(h @ w2 + b2)
    z = jax.nn.relu(h @ w3 + b3)
    d = jax.nn.relu(z @ w4 + b4)
    d = jax.nn.relu(d @ w5 + b5)
    xhat = jax.nn.sigmoid(d @ w6 + b6)
    return xhat, z


if __name__ == "__main__":
    key = jax.random.PRNGKey(0)
    key, kx = jax.random.split(key)
    params = init_params(key, LATENT_DIM)

    # --- small batch (single grid step) ---
    B = 8
    x = jax.random.uniform(kx, (B, IN_DIM), jnp.float32)
    xhat, z = ae_forward_jit(x, params)
    jax.block_until_ready((xhat, z))
    xhat_r, z_r = ae_forward_ref(x, params)
    assert xhat.shape == (B, IN_DIM) and z.shape == (B, LATENT_DIM)
    assert jnp.allclose(xhat, xhat_r, atol=1e-5, rtol=1e-4)
    assert jnp.allclose(z, z_r, atol=1e-5, rtol=1e-4)

    # --- batch not a multiple of the tile: exercises padding + multi-step grid ---
    key, kx2 = jax.random.split(key)
    B2 = 136
    x2 = jax.random.uniform(kx2, (B2, IN_DIM), jnp.float32)
    xhat2, z2 = ae_forward_jit(x2, params, batch_tile=64)
    jax.block_until_ready((xhat2, z2))
    xhat2_r, z2_r = ae_forward_ref(x2, params)
    assert xhat2.shape == (B2, IN_DIM) and z2.shape == (B2, LATENT_DIM)
    assert jnp.allclose(xhat2, xhat2_r, atol=1e-5, rtol=1e-4)
    assert jnp.allclose(z2, z2_r, atol=1e-5, rtol=1e-4)

    print("KERNEL_OK")
</pallas_src>

<mosaic_0001>
module attributes {stable_mosaic.version = 11 : i64} {
  func.func @ae_kernel(%arg0: i32, %arg1: memref<8x896xf32, #tpu.memory_space<vmem>>, %arg2: memref<896x32xf32, #tpu.memory_space<vmem>>, %arg3: memref<1x32xf32, #tpu.memory_space<vmem>>, %arg4: memref<32x16xf32, #tpu.memory_space<vmem>>, %arg5: memref<1x16xf32, #tpu.memory_space<vmem>>, %arg6: memref<16x128xf32, #tpu.memory_space<vmem>>, %arg7: memref<1x128xf32, #tpu.memory_space<vmem>>, %arg8: memref<128x16xf32, #tpu.memory_space<vmem>>, %arg9: memref<1x16xf32, #tpu.memory_space<vmem>>, %arg10: memref<16x32xf32, #tpu.memory_space<vmem>>, %arg11: memref<1x32xf32, #tpu.memory_space<vmem>>, %arg12: memref<32x896xf32, #tpu.memory_space<vmem>>, %arg13: memref<1x896xf32, #tpu.memory_space<vmem>>, %arg14: memref<8x896xf32, #tpu.memory_space<vmem>>, %arg15: memref<8x128xf32, #tpu.memory_space<vmem>>) attributes {dimension_semantics = [#tpu.dimension_semantics<parallel>], iteration_bounds = array<i64: 1>, scalar_prefetch = 0 : i64, scratch_operands = 0 : i64, tpu.core_type = #tpu.core_type<tc>, window_params = [{transform_indices = @transform_0, window_bounds = array<i64: 8, 896>}, {pipeline_mode = #tpu.pipeline_mode<synchronous>, transform_indices = @transform_1, window_bounds = array<i64: 896, 32>}, {pipeline_mode = #tpu.pipeline_mode<synchronous>, transform_indices = @transform_2, window_bounds = array<i64: 1, 32>}, {pipeline_mode = #tpu.pipeline_mode<synchronous>, transform_indices = @transform_3, window_bounds = array<i64: 32, 16>}, {pipeline_mode = #tpu.pipeline_mode<synchronous>, transform_indices = @transform_4, window_bounds = array<i64: 1, 16>}, {pipeline_mode = #tpu.pipeline_mode<synchronous>, transform_indices = @transform_5, window_bounds = array<i64: 16, 128>}, {pipeline_mode = #tpu.pipeline_mode<synchronous>, transform_indices = @transform_6, window_bounds = array<i64: 1, 128>}, {pipeline_mode = #tpu.pipeline_mode<synchronous>, transform_indices = @transform_7, window_bounds = array<i64: 128, 16>}, {pipeline_mode = #tpu.pipeline_mode<synchronous>, transform_indices = @transform_8, window_bounds = array<i64: 1, 16>}, {pipeline_mode = #tpu.pipeline_mode<synchronous>, transform_indices = @transform_9, window_bounds = array<i64: 16, 32>}, {pipeline_mode = #tpu.pipeline_mode<synchronous>, transform_indices = @transform_10, window_bounds = array<i64: 1, 32>}, {pipeline_mode = #tpu.pipeline_mode<synchronous>, transform_indices = @transform_11, window_bounds = array<i64: 32, 896>}, {pipeline_mode = #tpu.pipeline_mode<synchronous>, transform_indices = @transform_12, window_bounds = array<i64: 1, 896>}, {transform_indices = @transform_13, window_bounds = array<i64: 8, 896>}, {transform_indices = @transform_14, window_bounds = array<i64: 8, 128>}]} {
    %c0 = arith.constant 0 : index
    %c0_0 = arith.constant 0 : index
    %0 = vector.load %arg1[%c0, %c0_0] : memref<8x896xf32, #tpu.memory_space<vmem>>, vector<8x896xf32>
    %c0_1 = arith.constant 0 : index
    %c0_2 = arith.constant 0 : index
    %1 = vector.load %arg2[%c0_1, %c0_2] : memref<896x32xf32, #tpu.memory_space<vmem>>, vector<896x32xf32>
    %cst = arith.constant dense<0.000000e+00> : vector<8x32xf32>
    %2 = tpu.matmul %0, %1, %cst {dimension_numbers = #tpu.dot_dimension_numbers<[1], [0], [0], [1], [0, 0, 1, 1], [], []>} : vector<8x896xf32>, vector<896x32xf32>, vector<8x32xf32> -> vector<8x32xf32>
    %c0_3 = arith.constant 0 : index
    %c0_4 = arith.constant 0 : index
    %3 = vector.load %arg3[%c0_3, %c0_4] : memref<1x32xf32, #tpu.memory_space<vmem>>, vector<1x32xf32>
    %4 = vector.broadcast %3 : vector<1x32xf32> to vector<8x32xf32>
    %5 = arith.addf %2, %4 : vector<8x32xf32>
    %cst_5 = arith.constant 0.000000e+00 : f32
    %6 = vector.broadcast %cst_5 : f32 to vector<8x32xf32>
    %7 = arith.maximumf %5, %6 : vector<8x32xf32>
    %c0_6 = arith.constant 0 : index
    %c0_7 = arith.constant 0 : index
    %8 = vector.load %arg4[%c0_6, %c0_7] : memref<32x16xf32, #tpu.memory_space<vmem>>, vector<32x16xf32>
    %cst_8 = arith.constant dense<0.000000e+00> : vector<8x16xf32>
    %9 = tpu.matmul %7, %8, %cst_8 {dimension_numbers = #tpu.dot_dimension_numbers<[1], [0], [0], [1], [0, 0, 1, 1], [], []>} : vector<8x32xf32>, vector<32x16xf32>, vector<8x16xf32> -> vector<8x16xf32>
    %c0_9 = arith.constant 0 : index
    %c0_10 = arith.constant 0 : index
    %10 = vector.load %arg5[%c0_9, %c0_10] : memref<1x16xf32, #tpu.memory_space<vmem>>, vector<1x16xf32>
    %11 = vector.broadcast %10 : vector<1x16xf32> to vector<8x16xf32>
    %12 = arith.addf %9, %11 : vector<8x16xf32>
    %cst_11 = arith.constant 0.000000e+00 : f32
    %13 = vector.broadcast %cst_11 : f32 to vector<8x16xf32>
    %14 = arith.maximumf %12, %13 : vector<8x16xf32>
    %c0_12 = arith.constant 0 : index
    %c0_13 = arith.constant 0 : index
    %15 = vector.load %arg6[%c0_12, %c0_13] : memref<16x128xf32, #tpu.memory_space<vmem>>, vector<16x128xf32>
    %cst_14 = arith.constant dense<0.000000e+00> : vector<8x128xf32>
    %16 = tpu.matmul %14, %15, %cst_14 {dimension_numbers = #tpu.dot_dimension_numbers<[1], [0], [0], [1], [0, 0, 1, 1], [], []>} : vector<8x16xf32>, vector<16x128xf32>, vector<8x128xf32> -> vector<8x128xf32>
    %c0_15 = arith.constant 0 : index
    %c0_16 = arith.constant 0 : index
    %17 = vector.load %arg7[%c0_15, %c0_16] : memref<1x128xf32, #tpu.memory_space<vmem>>, vector<1x128xf32>
    %18 = vector.broadcast %17 : vector<1x128xf32> to vector<8x128xf32>
    %19 = arith.addf %16, %18 : vector<8x128xf32>
    %cst_17 = arith.constant 0.000000e+00 : f32
    %20 = vector.broadcast %cst_17 : f32 to vector<8x128xf32>
    %21 = arith.maximumf %19, %20 : vector<8x128xf32>
    %c0_18 = arith.constant 0 : index
    %c0_19 = arith.constant 0 : index
    %22 = vector.load %arg8[%c0_18, %c0_19] : memref<128x16xf32, #tpu.memory_space<vmem>>, vector<128x16xf32>
    %cst_20 = arith.constant dense<0.000000e+00> : vector<8x16xf32>
    %23 = tpu.matmul %21, %22, %cst_20 {dimension_numbers = #tpu.dot_dimension_numbers<[1], [0], [0], [1], [0, 0, 1, 1], [], []>} : vector<8x128xf32>, vector<128x16xf32>, vector<8x16xf32> -> vector<8x16xf32>
    %c0_21 = arith.constant 0 : index
    %c0_22 = arith.constant 0 : index
    %24 = vector.load %arg9[%c0_21, %c0_22] : memref<1x16xf32, #tpu.memory_space<vmem>>, vector<1x16xf32>
    %25 = vector.broadcast %24 : vector<1x16xf32> to vector<8x16xf32>
    %26 = arith.addf %23, %25 : vector<8x16xf32>
    %cst_23 = arith.constant 0.000000e+00 : f32
    %27 = vector.broadcast %cst_23 : f32 to vector<8x16xf32>
    %28 = arith.maximumf %26, %27 : vector<8x16xf32>
    %c0_24 = arith.constant 0 : index
    %c0_25 = arith.constant 0 : index
    %29 = vector.load %arg10[%c0_24, %c0_25] : memref<16x32xf32, #tpu.memory_space<vmem>>, vector<16x32xf32>
    %cst_26 = arith.constant dense<0.000000e+00> : vector<8x32xf32>
    %30 = tpu.matmul %28, %29, %cst_26 {dimension_numbers = #tpu.dot_dimension_numbers<[1], [0], [0], [1], [0, 0, 1, 1], [], []>} : vector<8x16xf32>, vector<16x32xf32>, vector<8x32xf32> -> vector<8x32xf32>
    %c0_27 = arith.constant 0 : index
    %c0_28 = arith.constant 0 : index
    %31 = vector.load %arg11[%c0_27, %c0_28] : memref<1x32xf32, #tpu.memory_space<vmem>>, vector<1x32xf32>
    %32 = vector.broadcast %31 : vector<1x32xf32> to vector<8x32xf32>
    %33 = arith.addf %30, %32 : vector<8x32xf32>
    %cst_29 = arith.constant 0.000000e+00 : f32
    %34 = vector.broadcast %cst_29 : f32 to vector<8x32xf32>
    %35 = arith.maximumf %33, %34 : vector<8x32xf32>
    %c0_30 = arith.constant 0 : index
    %c0_31 = arith.constant 0 : index
    %36 = vector.load %arg12[%c0_30, %c0_31] : memref<32x896xf32, #tpu.memory_space<vmem>>, vector<32x896xf32>
    %cst_32 = arith.constant dense<0.000000e+00> : vector<8x896xf32>
    %37 = tpu.matmul %35, %36, %cst_32 {dimension_numbers = #tpu.dot_dimension_numbers<[1], [0], [0], [1], [0, 0, 1, 1], [], []>} : vector<8x32xf32>, vector<32x896xf32>, vector<8x896xf32> -> vector<8x896xf32>
    %c0_33 = arith.constant 0 : index
    %c0_34 = arith.constant 0 : index
    %38 = vector.load %arg13[%c0_33, %c0_34] : memref<1x896xf32, #tpu.memory_space<vmem>>, vector<1x896xf32>
    %39 = vector.broadcast %38 : vector<1x896xf32> to vector<8x896xf32>
    %40 = arith.addf %37, %39 : vector<8x896xf32>
    %41 = arith.negf %40 : vector<8x896xf32>
    %42 = math.exp %41 : vector<8x896xf32>
    %cst_35 = arith.constant 1.000000e+00 : f32
    %43 = vector.broadcast %cst_35 : f32 to vector<8x896xf32>
    %44 = arith.addf %43, %42 : vector<8x896xf32>
    %45 = arith.divf %43, %44 : vector<8x896xf32>
    %c0_36 = arith.constant 0 : index
    %c0_37 = arith.constant 0 : index
    %46 = vector.load %arg14[%c0_36, %c0_37] : memref<8x896xf32, #tpu.memory_space<vmem>>, vector<8x896xf32>
    tpu.vector_store %arg14[%c0_36, %c0_37], %45 {strides = array<i32>} : memref<8x896xf32, #tpu.memory_space<vmem>>, vector<8x896xf32>,
    %c0_38 = arith.constant 0 : index
    %c0_39 = arith.constant 0 : index
    %47 = vector.load %arg15[%c0_38, %c0_39] : memref<8x128xf32, #tpu.memory_space<vmem>>, vector<8x128xf32>
    tpu.vector_store %arg15[%c0_38, %c0_39], %21 {strides = array<i32>} : memref<8x128xf32, #tpu.memory_space<vmem>>, vector<8x128xf32>,
    return
  }
  func.func @transform_0(%arg0: i32) -> (i32, i32) {
    %c0_i32 = arith.constant 0 : i32
    %c0_i32_0 = arith.constant 0 : i32
    return %arg0, %c0_i32 : i32, i32
  }
  func.func @transform_1(%arg0: i32) -> (i32, i32) {
    %c0_i32 = arith.constant 0 : i32
    %c0_i32_0 = arith.constant 0 : i32
    %c0_i32_1 = arith.constant 0 : i32
    return %c0_i32, %c0_i32_0 : i32, i32
  }
  func.func @transform_2(%arg0: i32) -> (i32, i32) {
    %c0_i32 = arith.constant 0 : i32
    %c0_i32_0 = arith.constant 0 : i32
    %c0_i32_1 = arith.constant 0 : i32
    return %c0_i32, %c0_i32_0 : i32, i32
  }
  func.func @transform_3(%arg0: i32) -> (i32, i32) {
    %c0_i32 = arith.constant 0 : i32
    %c0_i32_0 = arith.constant 0 : i32
    %c0_i32_1 = arith.constant 0 : i32
    return %c0_i32, %c0_i32_0 : i32, i32
  }
  func.func @transform_4(%arg0: i32) -> (i32, i32) {
    %c0_i32 = arith.constant 0 : i32
    %c0_i32_0 = arith.constant 0 : i32
    %c0_i32_1 = arith.constant 0 : i32
    return %c0_i32, %c0_i32_0 : i32, i32
  }
  func.func @transform_5(%arg0: i32) -> (i32, i32) {
    %c0_i32 = arith.constant 0 : i32
    %c0_i32_0 = arith.constant 0 : i32
    %c0_i32_1 = arith.constant 0 : i32
    return %c0_i32, %c0_i32_0 : i32, i32
  }
  func.func @transform_6(%arg0: i32) -> (i32, i32) {
    %c0_i32 = arith.constant 0 : i32
    %c0_i32_0 = arith.constant 0 : i32
    %c0_i32_1 = arith.constant 0 : i32
    return %c0_i32, %c0_i32_0 : i32, i32
  }
  func.func @transform_7(%arg0: i32) -> (i32, i32) {
    %c0_i32 = arith.constant 0 : i32
    %c0_i32_0 = arith.constant 0 : i32
    %c0_i32_1 = arith.constant 0 : i32
    return %c0_i32, %c0_i32_0 : i32, i32
  }
  func.func @transform_8(%arg0: i32) -> (i32, i32) {
    %c0_i32 = arith.constant 0 : i32
    %c0_i32_0 = arith.constant 0 : i32
    %c0_i32_1 = arith.constant 0 : i32
    return %c0_i32, %c0_i32_0 : i32, i32
  }
  func.func @transform_9(%arg0: i32) -> (i32, i32) {
    %c0_i32 = arith.constant 0 : i32
    %c0_i32_0 = arith.constant 0 : i32
    %c0_i32_1 = arith.constant 0 : i32
    return %c0_i32, %c0_i32_0 : i32, i32
  }
  func.func @transform_10(%arg0: i32) -> (i32, i32) {
    %c0_i32 = arith.constant 0 : i32
    %c0_i32_0 = arith.constant 0 : i32
    %c0_i32_1 = arith.constant 0 : i32
    return %c0_i32, %c0_i32_0 : i32, i32
  }
  func.func @transform_11(%arg0: i32) -> (i32, i32) {
    %c0_i32 = arith.constant 0 : i32
    %c0_i32_0 = arith.constant 0 : i32
    %c0_i32_1 = arith.constant 0 : i32
    return %c0_i32, %c0_i32_0 : i32, i32
  }
  func.func @transform_12(%arg0: i32) -> (i32, i32) {
    %c0_i32 = arith.constant 0 : i32
    %c0_i32_0 = arith.constant 0 : i32
    %c0_i32_1 = arith.constant 0 : i32
    return %c0_i32, %c0_i32_0 : i32, i32
  }
  func.func @transform_13(%arg0: i32) -> (i32, i32) {
    %c0_i32 = arith.constant 0 : i32
    %c0_i32_0 = arith.constant 0 : i32
    return %arg0, %c0_i32 : i32, i32
  }
  func.func @transform_14(%arg0: i32) -> (i32, i32) {
    %c0_i32 = arith.constant 0 : i32
    %c0_i32_0 = arith.constant 0 : i32
    return %arg0, %c0_i32 : i32, i32
  }
}

</mosaic_0001>

<llo_original>
// kernel: ae_forward.1
$region0: #{ae_forward.1}
  #allocation0 [shape = 'u32[]', space=smem, size = 0x4, offset = 0x4, fixed_abs, tag = 'smem constant byte address 0x4 - core index']
  #allocation1 [shape = 'u32[72,128]{1,0:T(1,128)}', space=vmem, size = 0x9000, scoped, tag = 'internal scratch']
  %s0 = inlined_call_operand.vmem [shape: f32[8,896], index: 0, kind: input, shape index: {}]
  %s1 = inlined_call_operand.vmem [shape: f32[896,32], index: 1, kind: input, shape index: {}]
  %s2 = inlined_call_operand.vmem [shape: f32[1,32], index: 2, kind: input, shape index: {}]
  %s3 = inlined_call_operand.vmem [shape: f32[32,16], index: 3, kind: input, shape index: {}]
  %s4 = inlined_call_operand.vmem [shape: f32[1,16], index: 4, kind: input, shape index: {}]
  %s5 = inlined_call_operand.vmem [shape: f32[16,128], index: 5, kind: input, shape index: {}]
  %s6 = inlined_call_operand.vmem [shape: f32[1,128], index: 6, kind: input, shape index: {}]
  %s7 = inlined_call_operand.vmem [shape: f32[128,16], index: 7, kind: input, shape index: {}]
  %s8 = inlined_call_operand.vmem [shape: f32[1,16], index: 8, kind: input, shape index: {}]
  %s9 = inlined_call_operand.vmem [shape: f32[16,32], index: 9, kind: input, shape index: {}]
  %s10 = inlined_call_operand.vmem [shape: f32[1,32], index: 10, kind: input, shape index: {}]
  %s11 = inlined_call_operand.vmem [shape: f32[32,896], index: 11, kind: input, shape index: {}]
  %s12 = inlined_call_operand.vmem [shape: f32[1,896], index: 12, kind: input, shape index: {}]
  %s13 = inlined_call_operand.hbm [shape: f32[8,896], index: 13, kind: output, shape index: {0}]
  %s14 = inlined_call_operand.hbm [shape: f32[8,128], index: 14, kind: output, shape index: {1}]
  %15 = xla_tuple %s13, %s14
  %s16 = sld [smem:[#allocation0]]
  $region70: #{ae_forward.1} parent=0
    _
  %s18 = ssub.s32 1, %s16
  %s19 = scalar_select 0, %s18, %s16
  $region1: #{ae_forward.1} parent=0
    #allocation2 [shape = 'u8[28672]{0}', space=vmem, size = 0x7000, scoped, tag = 'output window, operand 0, single buffered']
    #allocation3 [shape = 's32[1]{0}', space=sflag, size = 0x4, scoped, tag = 'scoped memory for ae_forward.1']
    #allocation4 [shape = 'u8[4096]{0}', space=vmem, size = 0x1000, scoped, tag = 'output window, operand 1, single buffered']
    #allocation5 [shape = 's32[1]{0}', space=sflag, size = 0x4, scoped, tag = 'scoped memory for ae_forward.1']
    %20 = vsyncpa [#allocation3], 0
    %21 = vsyncpa [#allocation5], 0
    // Predicated region
    $region2: #{ae_forward.1} parent=1 // pred_check
      _
    $region3: #{ae_forward.1} parent=1 // pred_check_branch
      %23 = sbr.rel (0) target = $region5
    $region4: #{ae_forward.1} parent=1 // pred_region
      _
    $region5: #{ae_forward.1} parent=1 // pred_fallthru
      _
    // Predicated region
    $region6: #{ae_forward.1} parent=1 // pred_check
      _
    $region7: #{ae_forward.1} parent=1 // pred_check_branch
      %25 = sbr.rel (0) target = $region9
    $region8: #{ae_forward.1} parent=1 // pred_region
      _
    $region9: #{ae_forward.1} parent=1 // pred_fallthru
      _
    // Predicated region
    $region10: #{ae_forward.1} parent=1 // pred_check
      _
    $region11: #{ae_forward.1} parent=1 // pred_check_branch
      %27 = sbr.rel (0) target = $region13
    $region12: #{ae_forward.1} parent=1 // pred_region
      _
    $region13: #{ae_forward.1} parent=1 // pred_fallthru
      _
    // Predicated region
    $region14: #{ae_forward.1} parent=1 // pred_check
      _
    $region15: #{ae_forward.1} parent=1 // pred_check_branch
      %29 = sbr.rel (0) target = $region17
    $region16: #{ae_forward.1} parent=1 // pred_region
      _
    $region17: #{ae_forward.1} parent=1 // pred_fallthru
      _
    // Predicated region
    $region18: #{ae_forward.1} parent=1 // pred_check
      _
    $region19: #{ae_forward.1} parent=1 // pred_check_branch
      %31 = sbr.rel (0) target = $region21
    $region20: #{ae_forward.1} parent=1 // pred_region
      _
    $region21: #{ae_forward.1} parent=1 // pred_fallthru
      _
    // Predicated region
    $region22: #{ae_forward.1} parent=1 // pred_check
      _
    $region23: #{ae_forward.1} parent=1 // pred_check_branch
      %33 = sbr.rel (0) target = $region25
    $region24: #{ae_forward.1} parent=1 // pred_region
      _
    $region25: #{ae_forward.1} parent=1 // pred_fallthru
      _
    // Predicated region
    $region26: #{ae_forward.1} parent=1 // pred_check
      _
    $region27: #{ae_forward.1} parent=1 // pred_check_branch
      %35 = sbr.rel (0) target = $region29
    $region28: #{ae_forward.1} parent=1 // pred_region
      _
    $region29: #{ae_forward.1} parent=1 // pred_fallthru
      _
    // Predicated region
    $region30: #{ae_forward.1} parent=1 // pred_check
      _
    $region31: #{ae_forward.1} parent=1 // pred_check_branch
      %37 = sbr.rel (0) target = $region33
    $region32: #{ae_forward.1} parent=1 // pred_region
      _
    $region33: #{ae_forward.1} parent=1 // pred_fallthru
      _
    // Predicated region
    $region34: #{ae_forward.1} parent=1 // pred_check
      _
    $region35: #{ae_forward.1} parent=1 // pred_check_branch
      %39 = sbr.rel (0) target = $region37
    $region36: #{ae_forward.1} parent=1 // pred_region
      _
    $region37: #{ae_forward.1} parent=1 // pred_fallthru
      _
    // Predicated region
    $region38: #{ae_forward.1} parent=1 // pred_check
      _
    $region39: #{ae_forward.1} parent=1 // pred_check_branch
      %41 = sbr.rel (0) target = $region41
    $region40: #{ae_forward.1} parent=1 // pred_region
      _
    $region41: #{ae_forward.1} parent=1 // pred_fallthru
      _
    // Predicated region
    $region42: #{ae_forward.1} parent=1 // pred_check
      _
    $region43: #{ae_forward.1} parent=1 // pred_check_branch
      %43 = sbr.rel (0) target = $region45
    $region44: #{ae_forward.1} parent=1 // pred_region
      _
    $region45: #{ae_forward.1} parent=1 // pred_fallthru
      _
    // Predicated region
    $region46: #{ae_forward.1} parent=1 // pred_check
      _
    $region47: #{ae_forward.1} parent=1 // pred_check_branch
      %45 = sbr.rel (0) target = $region49
    $region48: #{ae_forward.1} parent=1 // pred_region
      _
    $region49: #{ae_forward.1} parent=1 // pred_fallthru
      _
    // Predicated region
    $region50: #{ae_forward.1} parent=1 // pred_check
      _
    $region51: #{ae_forward.1} parent=1 // pred_check_branch
      %47 = sbr.rel (0) target = $region53
    $region52: #{ae_forward.1} parent=1 // pred_region
      _
    $region53: #{ae_forward.1} parent=1 // pred_fallthru
      _
    %v48 = vld [vmem:[%s0] sm:$0xff]
    %v49 = vld [vmem:[%s0 + $0x8] sm:$0xff]
    %v50 = vld [vmem:[%s0 + $0x10] sm:$0xff]
    %v51 = vld [vmem:[%s0 + $0x18] sm:$0xff]
    %v52 = vld [vmem:[%s0 + $0x20] sm:$0xff]
    %v53 = vld [vmem:[%s0 + $0x28] sm:$0xff]
    %v54 = vld [vmem:[%s0 + $0x30] sm:$0xff]
    %v55 = vld [vmem:[%s1] sm:$0xff]
    %v56 = vld [vmem:[%s1 + $0x8] sm:$0xff]
    %v57 = vld [vmem:[%s1 + $0x10] sm:$0xff]
    %v58 = vld [vmem:[%s1 + $0x18] sm:$0xff]
    %v59 = vld [vmem:[%s1 + $0x20] sm:$0xff]
    %v60 = vld [vmem:[%s1 + $0x28] sm:$0xff]
    %v61 = vld [vmem:[%s1 + $0x30] sm:$0xff]
    %v62 = vld [vmem:[%s1 + $0x38] sm:$0xff]
    %v63 = vld [vmem:[%s1 + $0x40] sm:$0xff]
    %v64 = vld [vmem:[%s1 + $0x48] sm:$0xff]
    %v65 = vld [vmem:[%s1 + $0x50] sm:$0xff]
    %v66 = vld [vmem:[%s1 + $0x58] sm:$0xff]
    %v67 = vld [vmem:[%s1 + $0x60] sm:$0xff]
    %v68 = vld [vmem:[%s1 + $0x68] sm:$0xff]
    %v69 = vld [vmem:[%s1 + $0x70] sm:$0xff]
    %v70 = vld [vmem:[%s1 + $0x78] sm:$0xff]
    %v71 = vld [vmem:[%s1 + $0x80] sm:$0xff]
    %v72 = vld [vmem:[%s1 + $0x88] sm:$0xff]
    %v73 = vld [vmem:[%s1 + $0x90] sm:$0xff]
    %v74 = vld [vmem:[%s1 + $0x98] sm:$0xff]
    %v75 = vld [vmem:[%s1 + $0xa0] sm:$0xff]
    %v76 = vld [vmem:[%s1 + $0xa8] sm:$0xff]
    %v77 = vld [vmem:[%s1 + $0xb0] sm:$0xff]
    %v78 = vld [vmem:[%s1 + $0xb8] sm:$0xff]
    %v79 = vld [vmem:[%s1 + $0xc0] sm:$0xff]
    %v80 = vld [vmem:[%s1 + $0xc8] sm:$0xff]
    %v81 = vld [vmem:[%s1 + $0xd0] sm:$0xff]
    %v82 = vld [vmem:[%s1 + $0xd8] sm:$0xff]
    %v83 = vld [vmem:[%s1 + $0xe0] sm:$0xff]
    %v84 = vld [vmem:[%s1 + $0xe8] sm:$0xff]
    %v85 = vld [vmem:[%s1 + $0xf0] sm:$0xff]
    %v86 = vld [vmem:[%s1 + $0xf8] sm:$0xff]
    %v87 = vld [vmem:[%s1 + $0x100] sm:$0xff]
    %v88 = vld [vmem:[%s1 + $0x108] sm:$0xff]
    %v89 = vld [vmem:[%s1 + $0x110] sm:$0xff]
    %v90 = vld [vmem:[%s1 + $0x118] sm:$0xff]
    %v91 = vld [vmem:[%s1 + $0x120] sm:$0xff]
    %v92 = vld [vmem:[%s1 + $0x128] sm:$0xff]
    %v93 = vld [vmem:[%s1 + $0x130] sm:$0xff]
    %v94 = vld [vmem:[%s1 + $0x138] sm:$0xff]
    %v95 = vld [vmem:[%s1 + $0x140] sm:$0xff]
    %v96 = vld [vmem:[%s1 + $0x148] sm:$0xff]
    %v97 = vld [vmem:[%s1 + $0x150] sm:$0xff]
    %v98 = vld [vmem:[%s1 + $0x158] sm:$0xff]
    %v99 = vld [vmem:[%s1 + $0x160] sm:$0xff]
    %v100 = vld [vmem:[%s1 + $0x168] sm:$0xff]
    %v101 = vld [vmem:[%s1 + $0x170] sm:$0xff]
    %v102 = vld [vmem:[%s1 + $0x178] sm:$0xff]
    %v103 = vld [vmem:[%s1 + $0x180] sm:$0xff]
    %v104 = vld [vmem:[%s1 + $0x188] sm:$0xff]
    %v105 = vld [vmem:[%s1 + $0x190] sm:$0xff]
    %v106 = vld [vmem:[%s1 + $0x198] sm:$0xff]
    %v107 = vld [vmem:[%s1 + $0x1a0] sm:$0xff]
    %v108 = vld [vmem:[%s1 + $0x1a8] sm:$0xff]
    %v109 = vld [vmem:[%s1 + $0x1b0] sm:$0xff]
    %v110 = vld [vmem:[%s1 + $0x1b8] sm:$0xff]
    %v111 = vld [vmem:[%s1 + $0x1c0] sm:$0xff]
    %v112 = vld [vmem:[%s1 + $0x1c8] sm:$0xff]
    %v113 = vld [vmem:[%s1 + $0x1d0] sm:$0xff]
    %v114 = vld [vmem:[%s1 + $0x1d8] sm:$0xff]
    %v115 = vld [vmem:[%s1 + $0x1e0] sm:$0xff]
    %v116 = vld [vmem:[%s1 + $0x1e8] sm:$0xff]
    %v117 = vld [vmem:[%s1 + $0x1f0] sm:$0xff]
    %v118 = vld [vmem:[%s1 + $0x1f8] sm:$0xff]
    %v119 = vld [vmem:[%s1 + $0x200] sm:$0xff]
    %v120 = vld [vmem:[%s1 + $0x208] sm:$0xff]
    %v121 = vld [vmem:[%s1 + $0x210] sm:$0xff]
    %v122 = vld [vmem:[%s1 + $0x218] sm:$0xff]
    %v123 = vld [vmem:[%s1 + $0x220] sm:$0xff]
    %v124 = vld [vmem:[%s1 + $0x228] sm:$0xff]
    %v125 = vld [vmem:[%s1 + $0x230] sm:$0xff]
    %v126 = vld [vmem:[%s1 + $0x238] sm:$0xff]
    %v127 = vld [vmem:[%s1 + $0x240] sm:$0xff]
    %v128 = vld [vmem:[%s1 + $0x248] sm:$0xff]
    %v129 = vld [vmem:[%s1 + $0x250] sm:$0xff]
    %v130 = vld [vmem:[%s1 + $0x258] sm:$0xff]
    %v131 = vld [vmem:[%s1 + $0x260] sm:$0xff]
    %v132 = vld [vmem:[%s1 + $0x268] sm:$0xff]
    %v133 = vld [vmem:[%s1 + $0x270] sm:$0xff]
    %v134 = vld [vmem:[%s1 + $0x278] sm:$0xff]
    %v135 = vld [vmem:[%s1 + $0x280] sm:$0xff]
    %v136 = vld [vmem:[%s1 + $0x288] sm:$0xff]
    %v137 = vld [vmem:[%s1 + $0x290] sm:$0xff]
    %v138 = vld [vmem:[%s1 + $0x298] sm:$0xff]
    %v139 = vld [vmem:[%s1 + $0x2a0] sm:$0xff]
    %v140 = vld [vmem:[%s1 + $0x2a8] sm:$0xff]
    %v141 = vld [vmem:[%s1 + $0x2b0] sm:$0xff]
    %v142 = vld [vmem:[%s1 + $0x2b8] sm:$0xff]
    %v143 = vld [vmem:[%s1 + $0x2c0] sm:$0xff]
    %v144 = vld [vmem:[%s1 + $0x2c8] sm:$0xff]
    %v145 = vld [vmem:[%s1 + $0x2d0] sm:$0xff]
    %v146 = vld [vmem:[%s1 + $0x2d8] sm:$0xff]
    %v147 = vld [vmem:[%s1 + $0x2e0] sm:$0xff]
    %v148 = vld [vmem:[%s1 + $0x2e8] sm:$0xff]
    %v149 = vld [vmem:[%s1 + $0x2f0] sm:$0xff]
    %v150 = vld [vmem:[%s1 + $0x2f8] sm:$0xff]
    %v151 = vld [vmem:[%s1 + $0x300] sm:$0xff]
    %v152 = vld [vmem:[%s1 + $0x308] sm:$0xff]
    %v153 = vld [vmem:[%s1 + $0x310] sm:$0xff]
    %v154 = vld [vmem:[%s1 + $0x318] sm:$0xff]
    %v155 = vld [vmem:[%s1 + $0x320] sm:$0xff]
    %v156 = vld [vmem:[%s1 + $0x328] sm:$0xff]
    %v157 = vld [vmem:[%s1 + $0x330] sm:$0xff]
    %v158 = vld [vmem:[%s1 + $0x338] sm:$0xff]
    %v159 = vld [vmem:[%s1 + $0x340] sm:$0xff]
    %v160 = vld [vmem:[%s1 + $0x348] sm:$0xff]
    %v161 = vld [vmem:[%s1 + $0x350] sm:$0xff]
    %v162 = vld [vmem:[%s1 + $0x358] sm:$0xff]
    %v163 = vld [vmem:[%s1 + $0x360] sm:$0xff]
    %v164 = vld [vmem:[%s1 + $0x368] sm:$0xff]
    %v165 = vld [vmem:[%s1 + $0x370] sm:$0xff]
    %v166 = vld [vmem:[%s1 + $0x378] sm:$0xff]
    %v167 = vld [vmem:[%s2] sm:$0x1]
    %v169 = vperm.slane %v167, 0
    %171 = vmatpush.msra.mxu0 %v70
    %172 = vmatpush.msra.mxu0 %v69
    %173 = vmatpush.msra.mxu0 %v68
    %174 = vmatpush.msra.mxu0 %v67
    %175 = vmatpush.msra.mxu0 %v66
    %176 = vmatpush.msra.mxu0 %v65
    %177 = vmatpush.msra.mxu0 %v64
    %178 = vmatpush.msra.mxu0 %v63
    %179 = vmatpush.msra.mxu0 %v62
    %180 = vmatpush.msra.mxu0 %v61
    %181 = vmatpush.msra.mxu0 %v60
    %182 = vmatpush.msra.mxu0 %v59
    %183 = vmatpush.msra.mxu0 %v58
    %184 = vmatpush.msra.mxu0 %v57
    %185 = vmatpush.msra.mxu0 %v56
    %186 = vmatpush.msra.mxu0 %v55
    %187 = vmatmul.f32.gmra.mxu0 %v48
    %v188 = vpop.f32.mrf.mxu0
    %v189 = vadd.f32 %v169, %v188
    %190 = vdwg.mxu0
    %191 = vmatpush.msra.mxu0 %v86
    %192 = vmatpush.msra.mxu0 %v85
    %193 = vmatpush.msra.mxu0 %v84
    %194 = vmatpush.msra.mxu0 %v83
    %195 = vmatpush.msra.mxu0 %v82
    %196 = vmatpush.msra.mxu0 %v81
    %197 = vmatpush.msra.mxu0 %v80
    %198 = vmatpush.msra.mxu0 %v79
    %199 = vmatpush.msra.mxu0 %v78
    %200 = vmatpush.msra.mxu0 %v77
    %201 = vmatpush.msra.mxu0 %v76
    %202 = vmatpush.msra.mxu0 %v75
    %203 = vmatpush.msra.mxu0 %v74
    %204 = vmatpush.msra.mxu0 %v73
    %205 = vmatpush.msra.mxu0 %v72
    %206 = vmatpush.msra.mxu0 %v71
    %207 = vmatmul.f32.gmra.mxu0 %v49
    %v208 = vpop.f32.mrf.mxu0
    %v209 = vadd.f32 %v189, %v208
    %210 = vdwg.mxu0
    %211 = vmatpush.msra.mxu0 %v102
    %212 = vmatpush.msra.mxu0 %v101
    %213 = vmatpush.msra.mxu0 %v100
    %214 = vmatpush.msra.mxu0 %v99
    %215 = vmatpush.msra.mxu0 %v98
    %216 = vmatpush.msra.mxu0 %v97
    %217 = vmatpush.msra.mxu0 %v96
    %218 = vmatpush.msra.mxu0 %v95
    %219 = vmatpush.msra.mxu0 %v94
    %220 = vmatpush.msra.mxu0 %v93
    %221 = vmatpush.msra.mxu0 %v92
    %222 = vmatpush.msra.mxu0 %v91
    %223 = vmatpush.msra.mxu0 %v90
    %224 = vmatpush.msra.mxu0 %v89
    %225 = vmatpush.msra.mxu0 %v88
    %226 = vmatpush.msra.mxu0 %v87
    %227 = vmatmul.f32.gmra.mxu0 %v50
    %v228 = vpop.f32.mrf.mxu0
    %v229 = vadd.f32 %v209, %v228
    %230 = vdwg.mxu0
    %231 = vmatpush.msra.mxu0 %v118
    %232 = vmatpush.msra.mxu0 %v117
    %233 = vmatpush.msra.mxu0 %v116
    %234 = vmatpush.msra.mxu0 %v115
    %235 = vmatpush.msra.mxu0 %v114
    %236 = vmatpush.msra.mxu0 %v113
    %237 = vmatpush.msra.mxu0 %v112
    %238 = vmatpush.msra.mxu0 %v111
    %239 = vmatpush.msra.mxu0 %v110
    %240 = vmatpush.msra.mxu0 %v109
    %241 = vmatpush.msra.mxu0 %v108
    %242 = vmatpush.msra.mxu0 %v107
    %243 = vmatpush.msra.mxu0 %v106
    %244 = vmatpush.msra.mxu0 %v105
    %245 = vmatpush.msra.mxu0 %v104
    %246 = vmatpush.msra.mxu0 %v103
    %247 = vmatmul.f32.gmra.mxu0 %v51
    %v248 = vpop.f32.mrf.mxu0
    %v249 = vadd.f32 %v229, %v248
    %250 = vdwg.mxu0
    %251 = vmatpush.msra.mxu0 %v134
    %252 = vmatpush.msra.mxu0 %v133
    %253 = vmatpush.msra.mxu0 %v132
    %254 = vmatpush.msra.mxu0 %v131
    %255 = vmatpush.msra.mxu0 %v130
    %256 = vmatpush.msra.mxu0 %v129
    %257 = vmatpush.msra.mxu0 %v128
    %258 = vmatpush.msra.mxu0 %v127
    %259 = vmatpush.msra.mxu0 %v126
    %260 = vmatpush.msra.mxu0 %v125
    %261 = vmatpush.msra.mxu0 %v124
    %262 = vmatpush.msra.mxu0 %v123
    %263 = vmatpush.msra.mxu0 %v122
    %264 = vmatpush.msra.mxu0 %v121
    %265 = vmatpush.msra.mxu0 %v120
    %266 = vmatpush.msra.mxu0 %v119
    %267 = vmatmul.f32.gmra.mxu0 %v52
    %v268 = vpop.f32.mrf.mxu0
    %v269 = vadd.f32 %v249, %v268
    %270 = vdwg.mxu0
    %271 = vmatpush.msra.mxu0 %v150
    %272 = vmatpush.msra.mxu0 %v149
    %273 = vmatpush.msra.mxu0 %v148
    %274 = vmatpush.msra.mxu0 %v147
    %275 = vmatpush.msra.mxu0 %v146
    %276 = vmatpush.msra.mxu0 %v145
    %277 = vmatpush.msra.mxu0 %v144
    %278 = vmatpush.msra.mxu0 %v143
    %279 = vmatpush.msra.mxu0 %v142
    %280 = vmatpush.msra.mxu0 %v141
    %281 = vmatpush.msra.mxu0 %v140
    %282 = vmatpush.msra.mxu0 %v139
    %283 = vmatpush.msra.mxu0 %v138
    %284 = vmatpush.msra.mxu0 %v137
    %285 = vmatpush.msra.mxu0 %v136
    %286 = vmatpush.msra.mxu0 %v135
    %287 = vmatmul.f32.gmra.mxu0 %v53
    %v288 = vpop.f32.mrf.mxu0
    %v289 = vadd.f32 %v269, %v288
    %290 = vdwg.mxu0
    %291 = vmatpush.msra.mxu0 %v166
    %292 = vmatpush.msra.mxu0 %v165
    %293 = vmatpush.msra.mxu0 %v164
    %294 = vmatpush.msra.mxu0 %v163
    %295 = vmatpush.msra.mxu0 %v162
    %296 = vmatpush.msra.mxu0 %v161
    %297 = vmatpush.msra.mxu0 %v160
    %298 = vmatpush.msra.mxu0 %v159
    %299 = vmatpush.msra.mxu0 %v158
    %300 = vmatpush.msra.mxu0 %v157
    %301 = vmatpush.msra.mxu0 %v156
    %302 = vmatpush.msra.mxu0 %v155
    %303 = vmatpush.msra.mxu0 %v154
    %304 = vmatpush.msra.mxu0 %v153
    %305 = vmatpush.msra.mxu0 %v152
    %306 = vmatpush.msra.mxu0 %v151
    %307 = vmatmul.f32.gmra.mxu0 %v54
    %v308 = vpop.f32.mrf.mxu0
    %v309 = vadd.f32 %v289, %v308
    %310 = vdwg.mxu0
    %v311 = vmax.f32 %v309, 0.0
    %v312 = vld [vmem:[%s3] sm:$0xff]
    %v313 = vld [vmem:[%s3 + $0x8] sm:$0xff]
    %v314 = vld [vmem:[%s3 + $0x10] sm:$0xff]
    %v315 = vld [vmem:[%s3 + $0x18] sm:$0xff]
    %v316 = vld [vmem:[%s4] sm:$0x1]
    %v318 = vperm.slane %v316, 0
    %vm320 = vcmask 261120
    %v322 = vsel %vm320, %v311, 0
    %324 = vmatpush.msra.mxu0 0.0
    %325 = vmatpush.msra.mxu0 0.0
    %326 = vmatpush.msra.mxu0 0.0
    %327 = vmatpush.msra.mxu0 0.0
    %328 = vmatpush.msra.mxu0 0.0
    %329 = vmatpush.msra.mxu0 0.0
    %330 = vmatpush.msra.mxu0 0.0
    %331 = vmatpush.msra.mxu0 0.0
    %332 = vmatpush.msra.mxu0 0.0
    %333 = vmatpush.msra.mxu0 0.0
    %334 = vmatpush.msra.mxu0 0.0
    %335 = vmatpush.msra.mxu0 0.0
    %336 = vmatpush.msra.mxu0 %v315
    %337 = vmatpush.msra.mxu0 %v314
    %338 = vmatpush.msra.mxu0 %v313
    %339 = vmatpush.msra.mxu0 %v312
    %340 = vmatmul.f32.gmra.mxu0 %v322
    %v341 = vpop.f32.mrf.mxu0
    %v342 = vadd.f32 %v318, %v341
    %343 = vdwg.mxu0
    %v344 = vmax.f32 %v342, 0.0
    %v345 = vld [vmem:[%s5] sm:$0xff]
    %v346 = vld [vmem:[%s5 + $0x8] sm:$0xff]
    %v347 = vld [vmem:[%s6] sm:$0x1]
    %v349 = vperm.slane %v347, 0
    %vm351 = vcmask 130048
    %v353 = vsel %vm351, %v344, 0
    %355 = vmatpush.msra.mxu0 0.0
    %356 = vmatpush.msra.mxu0 0.0
    %357 = vmatpush.msra.mxu0 0.0
    %358 = vmatpush.msra.mxu0 0.0
    %359 = vmatpush.msra.mxu0 0.0
    %360 = vmatpush.msra.mxu0 0.0
    %361 = vmatpush.msra.mxu0 0.0
    %362 = vmatpush.msra.mxu0 0.0
    %363 = vmatpush.msra.mxu0 0.0
    %364 = vmatpush.msra.mxu0 0.0
    %365 = vmatpush.msra.mxu0 0.0
    %366 = vmatpush.msra.mxu0 0.0
    %367 = vmatpush.msra.mxu0 0.0
    %368 = vmatpush.msra.mxu0 0.0
    %369 = vmatpush.msra.mxu0 %v346
    %370 = vmatpush.msra.mxu0 %v345
    %371 = vmatmul.f32.gmra.mxu0 %v353
    %v372 = vpop.f32.mrf.mxu0
    %v373 = vadd.f32 %v349, %v372
    %374 = vdwg.mxu0
    %v375 = vmax.f32 %v373, 0.0
    %v376 = vld [vmem:[%s7] sm:$0xff]
    %v377 = vld [vmem:[%s7 + $0x8] sm:$0xff]
    %v378 = vld [vmem:[%s7 + $0x10] sm:$0xff]
    %v379 = vld [vmem:[%s7 + $0x18] sm:$0xff]
    %v380 = vld [vmem:[%s7 + $0x20] sm:$0xff]
    %v381 = vld [vmem:[%s7 + $0x28] sm:$0xff]
    %v382 = vld [vmem:[%s7 + $0x30] sm:$0xff]
    %v383 = vld [vmem:[%s7 + $0x38] sm:$0xff]
    %v384 = vld [vmem:[%s7 + $0x40] sm:$0xff]
    %v385 = vld [vmem:[%s7 + $0x48] sm:$0xff]
    %v386 = vld [vmem:[%s7 + $0x50] sm:$0xff]
    %v387 = vld [vmem:[%s7 + $0x58] sm:$0xff]
    %v388 = vld [vmem:[%s7 + $0x60] sm:$0xff]
    %v389 = vld [vmem:[%s7 + $0x68] sm:$0xff]
    %v390 = vld [vmem:[%s7 + $0x70] sm:$0xff]
    %v391 = vld [vmem:[%s7 + $0x78] sm:$0xff]
    %v392 = vld [vmem:[%s8] sm:$0x1]
    %v394 = vperm.slane %v392, 0
    %396 = vmatpush.msra.mxu0 %v391
    %397 = vmatpush.msra.mxu0 %v390
    %398 = vmatpush.msra.mxu0 %v389
    %399 = vmatpush.msra.mxu0 %v388
    %400 = vmatpush.msra.mxu0 %v387
    %401 = vmatpush.msra.mxu0 %v386
    %402 = vmatpush.msra.mxu0 %v385
    %403 = vmatpush.msra.mxu0 %v384
    %404 = vmatpush.msra.mxu0 %v383
    %405 = vmatpush.msra.mxu0 %v382
    %406 = vmatpush.msra.mxu0 %v381
    %407 = vmatpush.msra.mxu0 %v380
    %408 = vmatpush.msra.mxu0 %v379
    %409 = vmatpush.msra.mxu0 %v378
    %410 = vmatpush.msra.mxu0 %v377
    %411 = vmatpush.msra.mxu0 %v376
    %412 = vmatmul.f32.gmra.mxu0 %v375
    %v413 = vpop.f32.mrf.mxu0
    %v414 = vadd.f32 %v394, %v413
    %415 = vdwg.mxu0
    %v416 = vmax.f32 %v414, 0.0
    %v417 = vld [vmem:[%s9] sm:$0xff]
    %v418 = vld [vmem:[%s9 + $0x8] sm:$0xff]
    %v419 = vld [vmem:[%s10] sm:$0x1]
    %v421 = vperm.slane %v419, 0
    %v424 = vsel %vm351, %v416, 0
    %426 = vmatpush.msra.mxu0 0.0
    %427 = vmatpush.msra.mxu0 0.0
    %428 = vmatpush.msra.mxu0 0.0
    %429 = vmatpush.msra.mxu0 0.0
    %430 = vmatpush.msra.mxu0 0.0
    %431 = vmatpush.msra.mxu0 0.0
    %432 = vmatpush.msra.mxu0 0.0
    %433 = vmatpush.msra.mxu0 0.0
    %434 = vmatpush.msra.mxu0 0.0
    %435 = vmatpush.msra.mxu0 0.0
    %436 = vmatpush.msra.mxu0 0.0
    %437 = vmatpush.msra.mxu0 0.0
    %438 = vmatpush.msra.mxu0 0.0
    %439 = vmatpush.msra.mxu0 0.0
    %440 = vmatpush.msra.mxu0 %v418
    %441 = vmatpush.msra.mxu0 %v417
    %442 = vmatmul.f32.gmra.mxu0 %v424
    %v443 = vpop.f32.mrf.mxu0
    %v444 = vadd.f32 %v421, %v443
    %445 = vdwg.mxu0
    %v446 = vmax.f32 %v444, 0.0
    %v447 = vld [vmem:[%s11] sm:$0xff]
    %v448 = vld [vmem:[%s11 + $0x8] sm:$0xff]
    %v449 = vld [vmem:[%s11 + $0x10] sm:$0xff]
    %v450 = vld [vmem:[%s11 + $0x18] sm:$0xff]
    %v451 = vld [vmem:[%s11 + $0x20] sm:$0xff]
    %v452 = vld [vmem:[%s11 + $0x28] sm:$0xff]
    %v453 = vld [vmem:[%s11 + $0x30] sm:$0xff]
    %v454 = vld [vmem:[%s11 + $0x38] sm:$0xff]
    %v455 = vld [vmem:[%s11 + $0x40] sm:$0xff]
    %v456 = vld [vmem:[%s11 + $0x48] sm:$0xff]
    %v457 = vld [vmem:[%s11 + $0x50] sm:$0xff]
    %v458 = vld [vmem:[%s11 + $0x58] sm:$0xff]
    %v459 = vld [vmem:[%s11 + $0x60] sm:$0xff]
    %v460 = vld [vmem:[%s11 + $0x68] sm:$0xff]
    %v461 = vld [vmem:[%s11 + $0x70] sm:$0xff]
    %v462 = vld [vmem:[%s11 + $0x78] sm:$0xff]
    %v463 = vld [vmem:[%s11 + $0x80] sm:$0xff]
    %v464 = vld [vmem:[%s11 + $0x88] sm:$0xff]
    %v465 = vld [vmem:[%s11 + $0x90] sm:$0xff]
    %v466 = vld [vmem:[%s11 + $0x98] sm:$0xff]
    %v467 = vld [vmem:[%s11 + $0xa0] sm:$0xff]
    %v468 = vld [vmem:[%s11 + $0xa8] sm:$0xff]
    %v469 = vld [vmem:[%s11 + $0xb0] sm:$0xff]
    %v470 = vld [vmem:[%s11 + $0xb8] sm:$0xff]
    %v471 = vld [vmem:[%s11 + $0xc0] sm:$0xff]
    %v472 = vld [vmem:[%s11 + $0xc8] sm:$0xff]
    %v473 = vld [vmem:[%s11 + $0xd0] sm:$0xff]
    %v474 = vld [vmem:[%s11 + $0xd8] sm:$0xff]
    %v475 = vld [vmem:[%s12] sm:$0xff]
    %v477 = vperm.slane %v475, 0
    %v478 = vperm.slane %v475, 1
    %v479 = vperm.slane %v475, 2
    %v480 = vperm.slane %v475, 3
    %v481 = vperm.slane %v475, 4
    %v482 = vperm.slane %v475, 5
    %v483 = vperm.slane %v475, 6
    %v492 = vsel %vm320, %v446, 0
    %494 = vmatpush.msra.mxu0 0.0
    %495 = vmatpush.msra.mxu0 0.0
    %496 = vmatpush.msra.mxu0 0.0
    %497 = vmatpush.msra.mxu0 0.0
    %498 = vmatpush.msra.mxu0 0.0
    %499 = vmatpush.msra.mxu0 0.0
    %500 = vmatpush.msra.mxu0 0.0
    %501 = vmatpush.msra.mxu0 0.0
    %502 = vmatpush.msra.mxu0 0.0
    %503 = vmatpush.msra.mxu0 0.0
    %504 = vmatpush.msra.mxu0 0.0
    %505 = vmatpush.msra.mxu0 0.0
    %506 = vmatpush.msra.mxu0 %v468
    %507 = vmatpush.msra.mxu0 %v461
    %508 = vmatpush.msra.mxu0 %v454
    %509 = vmatpush.msra.mxu0 %v447
    %510 = vmatmul.f32.gmra.mxu0 %v492
    %v511 = vpop.f32.mrf.mxu0
    %v512 = vadd.f32 %v477, %v511
    %513 = vdwg.mxu0
    %514 = vmatpush.msra.mxu0 0.0
    %515 = vmatpush.msra.mxu0 0.0
    %516 = vmatpush.msra.mxu0 0.0
    %517 = vmatpush.msra.mxu0 0.0
    %518 = vmatpush.msra.mxu0 0.0
    %519 = vmatpush.msra.mxu0 0.0
    %520 = vmatpush.msra.mxu0 0.0
    %521 = vmatpush.msra.mxu0 0.0
    %522 = vmatpush.msra.mxu0 0.0
    %523 = vmatpush.msra.mxu0 0.0
    %524 = vmatpush.msra.mxu0 0.0
    %525 = vmatpush.msra.mxu0 0.0
    %526 = vmatpush.msra.mxu0 %v469
    %527 = vmatpush.msra.mxu0 %v462
    %528 = vmatpush.msra.mxu0 %v455
    %529 = vmatpush.msra.mxu0 %v448
    %530 = vmatmul.f32.gmra.mxu0 %v492
    %v531 = vpop.f32.mrf.mxu0
    %v532 = vadd.f32 %v478, %v531
    %533 = vdwg.mxu0
    %534 = vmatpush.msra.mxu0 0.0
    %535 = vmatpush.msra.mxu0 0.0
    %536 = vmatpush.msra.mxu0 0.0
    %537 = vmatpush.msra.mxu0 0.0
    %538 = vmatpush.msra.mxu0 0.0
    %539 = vmatpush.msra.mxu0 0.0
    %540 = vmatpush.msra.mxu0 0.0
    %541 = vmatpush.msra.mxu0 0.0
    %542 = vmatpush.msra.mxu0 0.0
    %543 = vmatpush.msra.mxu0 0.0
    %544 = vmatpush.msra.mxu0 0.0
    %545 = vmatpush.msra.mxu0 0.0
    %546 = vmatpush.msra.mxu0 %v470
    %547 = vmatpush.msra.mxu0 %v463
    %548 = vmatpush.msra.mxu0 %v456
    %549 = vmatpush.msra.mxu0 %v449
    %550 = vmatmul.f32.gmra.mxu0 %v492
    %v551 = vpop.f32.mrf.mxu0
    %v552 = vadd.f32 %v479, %v551
    %553 = vdwg.mxu0
    %554 = vmatpush.msra.mxu0 0.0
    %555 = vmatpush.msra.mxu0 0.0
    %556 = vmatpush.msra.mxu0 0.0
    %557 = vmatpush.msra.mxu0 0.0
    %558 = vmatpush.msra.mxu0 0.0
    %559 = vmatpush.msra.mxu0 0.0
    %560 = vmatpush.msra.mxu0 0.0
    %561 = vmatpush.msra.mxu0 0.0
    %562 = vmatpush.msra.mxu0 0.0
    %563 = vmatpush.msra.mxu0 0.0
    %564 = vmatpush.msra.mxu0 0.0
    %565 = vmatpush.msra.mxu0 0.0
    %566 = vmatpush.msra.mxu0 %v471
    %567 = vmatpush.msra.mxu0 %v464
    %568 = vmatpush.msra.mxu0 %v457
    %569 = vmatpush.msra.mxu0 %v450
    %570 = vmatmul.f32.gmra.mxu0 %v492
    %v571 = vpop.f32.mrf.mxu0
    %v572 = vadd.f32 %v480, %v571
    %573 = vdwg.mxu0
    %574 = vmatpush.msra.mxu0 0.0
    %575 = vmatpush.msra.mxu0 0.0
    %576 = vmatpush.msra.mxu0 0.0
    %577 = vmatpush.msra.mxu0 0.0
    %578 = vmatpush.msra.mxu0 0.0
    %579 = vmatpush.msra.mxu0 0.0
    %580 = vmatpush.msra.mxu0 0.0
    %581 = vmatpush.msra.mxu0 0.0
    %582 = vmatpush.msra.mxu0 0.0
    %583 = vmatpush.msra.mxu0 0.0
    %584 = vmatpush.msra.mxu0 0.0
    %585 = vmatpush.msra.mxu0 0.0
    %586 = vmatpush.msra.mxu0 %v472
    %587 = vmatpush.msra.mxu0 %v465
    %588 = vmatpush.msra.mxu0 %v458
    %589 = vmatpush.msra.mxu0 %v451
    %590 = vmatmul.f32.gmra.mxu0 %v492
    %v591 = vpop.f32.mrf.mxu0
    %v592 = vadd.f32 %v481, %v591
    %593 = vdwg.mxu0
    %594 = vmatpush.msra.mxu0 0.0
    %595 = vmatpush.msra.mxu0 0.0
    %596 = vmatpush.msra.mxu0 0.0
    %597 = vmatpush.msra.mxu0 0.0
    %598 = vmatpush.msra.mxu0 0.0
    %599 = vmatpush.msra.mxu0 0.0
    %600 = vmatpush.msra.mxu0 0.0
    %601 = vmatpush.msra.mxu0 0.0
    %602 = vmatpush.msra.mxu0 0.0
    %603 = vmatpush.msra.mxu0 0.0
    %604 = vmatpush.msra.mxu0 0.0
    %605 = vmatpush.msra.mxu0 0.0
    %606 = vmatpush.msra.mxu0 %v473
    %607 = vmatpush.msra.mxu0 %v466
    %608 = vmatpush.msra.mxu0 %v459
    %609 = vmatpush.msra.mxu0 %v452
    %610 = vmatmul.f32.gmra.mxu0 %v492
    %v611 = vpop.f32.mrf.mxu0
    %v612 = vadd.f32 %v482, %v611
    %613 = vdwg.mxu0
    %614 = vmatpush.msra.mxu0 0.0
    %615 = vmatpush.msra.mxu0 0.0
    %616 = vmatpush.msra.mxu0 0.0
    %617 = vmatpush.msra.mxu0 0.0
    %618 = vmatpush.msra.mxu0 0.0
    %619 = vmatpush.msra.mxu0 0.0
    %620 = vmatpush.msra.mxu0 0.0
    %621 = vmatpush.msra.mxu0 0.0
    %622 = vmatpush.msra.mxu0 0.0
    %623 = vmatpush.msra.mxu0 0.0
    %624 = vmatpush.msra.mxu0 0.0
    %625 = vmatpush.msra.mxu0 0.0
    %626 = vmatpush.msra.mxu0 %v474
    %627 = vmatpush.msra.mxu0 %v467
    %628 = vmatpush.msra.mxu0 %v460
    %629 = vmatpush.msra.mxu0 %v453
    %630 = vmatmul.f32.gmra.mxu0 %v492
    %v631 = vpop.f32.mrf.mxu0
    %v632 = vadd.f32 %v483, %v631
    %633 = vdwg.mxu0
    %v634 = vxor.u32 %v512, 2147483648
    %v635 = vxor.u32 %v532, 2147483648
    %v636 = vxor.u32 %v552, 2147483648
    %v637 = vxor.u32 %v572, 2147483648
    %v638 = vxor.u32 %v592, 2147483648
    %v639 = vxor.u32 %v612, 2147483648
    %v640 = vxor.u32 %v632, 2147483648
    %v641 = vmul.f32 %v634, 1.442695
    %v642 = vpow.pop %v641
    %v643 = vmul.f32 %v635, 1.442695
    %v644 = vpow.pop %v643
    %v645 = vmul.f32 %v636, 1.442695
    %v646 = vpow.pop %v645
    %v647 = vmul.f32 %v637, 1.442695
    %v648 = vpow.pop %v647
    %v649 = vmul.f32 %v638, 1.442695
    %v650 = vpow.pop %v649
    %v651 = vmul.f32 %v639, 1.442695
    %v652 = vpow.pop %v651
    %v653 = vmul.f32 %v640, 1.442695
    %v654 = vpow.pop %v653
    %v655 = vadd.f32 %v642, 1.0
    %v656 = vadd.f32 %v644, 1.0
    %v657 = vadd.f32 %v646, 1.0
    %v658 = vadd.f32 %v648, 1.0
    %v659 = vadd.f32 %v650, 1.0
    %v660 = vadd.f32 %v652, 1.0
    %v661 = vadd.f32 %v654, 1.0
    %v662 = vrcp.pop %v655
    %v663 = vmul.f32 %v655, %v662
    %v664 = vsub.f32 1.0, %v663
    %v665 = vmul.f32 %v662, %v664
    %v666 = vadd.f32 %v662, %v665
    %vm667 = vweird.f32 %v655
    %vm668 = vweird.f32 %v662
    %vm669 = vmor %vm667, %vm668
    %v670 = vsel %vm669, %v662, %v666
    %v671 = vand.u32 2147483647, %v655
    %vm672 = vcmp.eq.f32.partialorder %v671, 8.507059e+37
    %v673 = vand.u32 %v655, 2147483648
    %v674 = vor.u32 1.1754944e-38, %v673
    %v675 = vsel %vm672, %v674, %v670
    %v676 = vmul.f32 1.0, %v675
    %v677 = vrcp.pop %v656
    %v678 = vmul.f32 %v656, %v677
    %v679 = vsub.f32 1.0, %v678
    %v680 = vmul.f32 %v677, %v679
    %v681 = vadd.f32 %v677, %v680
    %vm682 = vweird.f32 %v656
    %vm683 = vweird.f32 %v677
    %vm684 = vmor %vm682, %vm683
    %v685 = vsel %vm684, %v677, %v681
    %v686 = vand.u32 2147483647, %v656
    %vm687 = vcmp.eq.f32.partialorder %v686, 8.507059e+37
    %v688 = vand.u32 %v656, 2147483648
    %v689 = vor.u32 1.1754944e-38, %v688
    %v690 = vsel %vm687, %v689, %v685
    %v691 = vmul.f32 1.0, %v690
    %v692 = vrcp.pop %v657
    %v693 = vmul.f32 %v657, %v692
    %v694 = vsub.f32 1.0, %v693
    %v695 = vmul.f32 %v692, %v694
    %v696 = vadd.f32 %v692, %v695
    %vm697 = vweird.f32 %v657
    %vm698 = vweird.f32 %v692
    %vm699 = vmor %vm697, %vm698
    %v700 = vsel %vm699, %v692, %v696
    %v701 = vand.u32 2147483647, %v657
    %vm702 = vcmp.eq.f32.partialorder %v701, 8.507059e+37
    %v703 = vand.u32 %v657, 2147483648
    %v704 = vor.u32 1.1754944e-38, %v703
    %v705 = vsel %vm702, %v704, %v700
    %v706 = vmul.f32 1.0, %v705
    %v707 = vrcp.pop %v658
    %v708 = vmul.f32 %v658, %v707
    %v709 = vsub.f32 1.0, %v708
    %v710 = vmul.f32 %v707, %v709
    %v711 = vadd.f32 %v707, %v710
    %vm712 = vweird.f32 %v658
    %vm713 = vweird.f32 %v707
    %vm714 = vmor %vm712, %vm713
    %v715 = vsel %vm714, %v707, %v711
    %v716 = vand.u32 2147483647, %v658
    %vm717 = vcmp.eq.f32.partialorder %v716, 8.507059e+37
    %v718 = vand.u32 %v658, 2147483648
    %v719 = vor.u32 1.1754944e-38, %v718
    %v720 = vsel %vm717, %v719, %v715
    %v721 = vmul.f32 1.0, %v720
    %v722 = vrcp.pop %v659
    %v723 = vmul.f32 %v659, %v722
    %v724 = vsub.f32 1.0, %v723
    %v725 = vmul.f32 %v722, %v724
    %v726 = vadd.f32 %v722, %v725
    %vm727 = vweird.f32 %v659
    %vm728 = vweird.f32 %v722
    %vm729 = vmor %vm727, %vm728
    %v730 = vsel %vm729, %v722, %v726
    %v731 = vand.u32 2147483647, %v659
    %vm732 = vcmp.eq.f32.partialorder %v731, 8.507059e+37
    %v733 = vand.u32 %v659, 2147483648
    %v734 = vor.u32 1.1754944e-38, %v733
    %v735 = vsel %vm732, %v734, %v730
    %v736 = vmul.f32 1.0, %v735
    %v737 = vrcp.pop %v660
    %v738 = vmul.f32 %v660, %v737
    %v739 = vsub.f32 1.0, %v738
    %v740 = vmul.f32 %v737, %v739
    %v741 = vadd.f32 %v737, %v740
    %vm742 = vweird.f32 %v660
    %vm743 = vweird.f32 %v737
    %vm744 = vmor %vm742, %vm743
    %v745 = vsel %vm744, %v737, %v741
    %v746 = vand.u32 2147483647, %v660
    %vm747 = vcmp.eq.f32.partialorder %v746, 8.507059e+37
    %v748 = vand.u32 %v660, 2147483648
    %v749 = vor.u32 1.1754944e-38, %v748
    %v750 = vsel %vm747, %v749, %v745
    %v751 = vmul.f32 1.0, %v750
    %v752 = vrcp.pop %v661
    %v753 = vmul.f32 %v661, %v752
    %v754 = vsub.f32 1.0, %v753
    %v755 = vmul.f32 %v752, %v754
    %v756 = vadd.f32 %v752, %v755
    %vm757 = vweird.f32 %v661
    %vm758 = vweird.f32 %v752
    %vm759 = vmor %vm757, %vm758
    %v760 = vsel %vm759, %v752, %v756
    %v761 = vand.u32 2147483647, %v661
    %vm762 = vcmp.eq.f32.partialorder %v761, 8.507059e+37
    %v763 = vand.u32 %v661, 2147483648
    %v764 = vor.u32 1.1754944e-38, %v763
    %v765 = vsel %vm762, %v764, %v760
    %v766 = vmul.f32 1.0, %v765
    %767 = vst [vmem:[#allocation2] sm:$0xff] %v676
    %768 = vst [vmem:[#allocation2 + $0x8] sm:$0xff] %v691
    %769 = vst [vmem:[#allocation2 + $0x10] sm:$0xff] %v706
    %770 = vst [vmem:[#allocation2 + $0x18] sm:$0xff] %v721
    %771 = vst [vmem:[#allocation2 + $0x20] sm:$0xff] %v736
    %772 = vst [vmem:[#allocation2 + $0x28] sm:$0xff] %v751
    %773 = vst [vmem:[#allocation2 + $0x30] sm:$0xff] %v766
    %774 = vst [vmem:[#allocation4] sm:$0xff] %v375
    // Predicated region
    $region54: #{ae_forward.1} parent=1 // pred_check
      _
    $region55: #{ae_forward.1} parent=1 // pred_check_branch
      %776 = sbr.rel (0) target = $region57
    $region56: #{ae_forward.1} parent=1 // pred_region
      %778 = vsyncadd [#allocation3], 0
      %s780 = sshll.u32 [#allocation2], 4
      %s781 = int_to_ptr.vmem [resolvable:$true] %s780
      %s782 = sshll.u32 %s13, 4
      %s783 = int_to_ptr.hbm [resolvable:$true] %s782
      %785 = dma.vmem_to_hbm [thread:$0]  %s781, 896, %s783, [#allocation3]
    $region57: #{ae_forward.1} parent=1 // pred_fallthru
      _
    // Predicated region
    $region58: #{ae_forward.1} parent=1 // pred_check
      _
    $region59: #{ae_forward.1} parent=1 // pred_check_branch
      %787 = sbr.rel (0) target = $region61
    $region60: #{ae_forward.1} parent=1 // pred_region
      %789 = vsyncadd [#allocation5], 0
      %s791 = sshll.u32 [#allocation4], 4
      %s792 = int_to_ptr.vmem [resolvable:$true] %s791
      %s793 = sshll.u32 %s14, 4
      %s794 = int_to_ptr.hbm [resolvable:$true] %s793
      %796 = dma.vmem_to_hbm [thread:$0]  %s792, 128, %s794, [#allocation5]
    $region61: #{ae_forward.1} parent=1 // pred_fallthru
      _
    // Predicated region
    $region62: #{ae_forward.1} parent=1 // pred_check
      _
    $region63: #{ae_forward.1} parent=1 // pred_check_branch
      %798 = sbr.rel (0) target = $region65
    $region64: #{ae_forward.1} parent=1 // pred_region
      %800 = dma.done [#allocation3], 896
    $region65: #{ae_forward.1} parent=1 // pred_fallthru
      _
    // Predicated region
    $region66: #{ae_forward.1} parent=1 // pred_check
      _
    $region67: #{ae_forward.1} parent=1 // pred_check_branch
      %802 = sbr.rel (0) target = $region69
    $region68: #{ae_forward.1} parent=1 // pred_region
      %804 = dma.done [#allocation5], 128
    $region69: #{ae_forward.1} parent=1 // pred_fallthru
      _
    %805 = vsyncpa [#allocation3], 1
    %806 = vsyncpa [#allocation5], 1

</llo_original>
